<compile_context>
chip_gen: v5e
topology: v5e:2x2
jax: 0.10.0
libtpu: 0.0.40
codegen_flags: <defaults>
</compile_context>

<pallas_src>
import functools

import jax
import jax.numpy as jnp
from jax.experimental import pallas as pl
from jax.experimental.pallas import tpu as pltpu


def _cosface_kernel(emb_ref, ker_ref, label_ref, out_ref, *, s, m):
    # Operands are already L2-normalized (norms folded into the bf16 casts in the
    # wrapper), so the MXU result IS cos_theta (f32 accumulation).
    dots = jnp.dot(emb_ref[...], ker_ref[...],
                   preferred_element_type=jnp.float32)           # (TB, TC) f32

    # clamp(cos, -1, 1) * s == clamp(cos * s, -s, s): scale once, clamp once.
    x = jnp.clip(dots * s, -s, s)

    tb, tc = out_ref.shape
    col_base = pl.program_id(0) * tc                             # classes = OUTER grid axis
    col_ids = jax.lax.broadcasted_iota(jnp.int32, (tb, tc), 1)   # tile-local column ids
    # Subtract col_base from the (TB,1) label instead of adding it to the iota.
    # col_ids >= 0, so label == -1 never matches -> no extra guard needed.
    hit = col_ids == (label_ref[...] - col_base)

    out_ref[...] = jnp.where(hit, x - s * m, x)


def cosface_forward(embeddings, kernel, label, *, s=64.0, m=0.35,
                    tile_b=None, tile_c=None):
    """Pallas CosFace forward.

    embeddings: (B, D) float
    kernel:     (D, C) float   (class weights, columns = classes)
    label:      (B,)   int32   (-1 => no margin for that row)
    returns:    (B, C) float32 scaled logits
    """
    B, D = embeddings.shape
    Dk, C = kernel.shape
    assert D == Dk

    # Lane-aligned default tiles sized for the smallest scoped-VMEM default
    # (v5e: 16 MiB).  For D~512: emb 512*D bf16 + weight D*1024 bf16 + 512*1024
    # f32 out, double-buffered ~= 7 MiB.  Fall back to full-dim tiles if the
    # shape doesn't divide (demo-friendly; TODO(synk): masked tail path for
    # huge non-multiple C).
    if tile_b is None:
        tile_b = min(B, 512)
    if tile_c is None:
        tile_c = min(C, 1024)
    if B % tile_b:
        tile_b = B
    if C % tile_c:
        tile_c = C

    eps = jnp.float32(1e-12)

    # Row norms (tiny O(B*D) reduction) and normalized bf16 embeddings.
    emb_f32 = embeddings.astype(jnp.float32)
    inv_row = jax.lax.rsqrt(jnp.sum(emb_f32 * emb_f32, axis=1, keepdims=True) + eps)
    emb_bf16 = (emb_f32 * inv_row).astype(jnp.bfloat16)

    # Column norms with f32 accumulation; cast->square->reduce fuses into one
    # pass over the weights, and the scale+bf16 cast into a second single pass.
    ker_sq = jnp.sum(jnp.square(kernel.astype(jnp.float32)), axis=0, keepdims=True)
    inv_col = jax.lax.rsqrt(ker_sq + eps)                        # (1, C)
    ker_bf16 = (kernel.astype(jnp.float32) * inv_col).astype(jnp.bfloat16)

    label2d = label.reshape(B, 1).astype(jnp.int32)

    kern = functools.partial(_cosface_kernel, s=float(s), m=float(m))

    # Classes on the OUTER grid axis: the weight tile index map is constant
    # across the inner batch sweep, so Pallas keeps it resident in VMEM and the
    # (D, C) weights are streamed from HBM exactly once.
    grid = (C // tile_c, B // tile_b)

    cost = pl.CostEstimate(
        flops=2 * B * D * C,
        transcendentals=0,
        bytes_accessed=2 * D * C + 2 * B * D + 4 * B + 4 * B * C,
    )

    return pl.pallas_call(
        kern,
        out_shape=jax.ShapeDtypeStruct((B, C), jnp.float32),
        grid_spec=pltpu.PrefetchScalarGridSpec(
            num_scalar_prefetch=0,
            grid=grid,
            in_specs=[
                pl.BlockSpec((tile_b, D), lambda j, i: (i, 0)),   # embeddings (normalized bf16)
                pl.BlockSpec((D, tile_c), lambda j, i: (0, j)),   # weights (normalized bf16)
                pl.BlockSpec((tile_b, 1), lambda j, i: (i, 0)),   # labels
            ],
            out_specs=pl.BlockSpec((tile_b, tile_c), lambda j, i: (i, j)),
        ),
        compiler_params=pltpu.CompilerParams(
            dimension_semantics=("parallel", "parallel")),
        cost_estimate=cost,
    )(emb_bf16, ker_bf16, label2d)


if __name__ == "__main__":
    key = jax.random.PRNGKey(0)
    k_emb, k_ker, k_lab = jax.random.split(key, 3)

    B, D, C = 8, 32, 128          # batch, in_features, out_features
    s_scale, margin = 64.0, 0.35

    embeddings = jax.random.normal(k_emb, (B, D), dtype=jnp.float32)
    # nn.init.normal_(kernel, std=0.01)
    kernel = 0.01 * jax.random.normal(k_ker, (D, C), dtype=jnp.float32)
    label = jax.random.randint(k_lab, (B,), 0, C, dtype=jnp.int32)
    label = label.at[3].set(-1)   # one "ignored" row, like label != -1 filtering

    out = cosface_forward(embeddings, kernel, label, s=s_scale, m=margin)
    out = jax.block_until_ready(out)

    # pure-JAX f32 reference (PyTorch semantics); loose tolerance because the
    # kernel runs the MXU matmul with bf16 operands (f32 accumulation).
    emb_n = embeddings / jnp.linalg.norm(embeddings, axis=1, keepdims=True)
    ker_n = kernel / jnp.linalg.norm(kernel, axis=0, keepdims=True)
    cos = jnp.clip(emb_n @ ker_n, -1.0, 1.0)
    one_hot = (jnp.arange(C)[None, :] == label[:, None]) & (label[:, None] != -1)
    ref = (cos - jnp.where(one_hot, margin, 0.0)) * s_scale
    max_err = float(jnp.max(jnp.abs(out - ref)))
    assert max_err < 0.25, f"max abs error {max_err}"

    print("KERNEL_OK")
</pallas_src>

<mosaic_0001>
module attributes {stable_mosaic.version = 11 : i64} {
  func.func @_cosface_kernel(%arg0: i32, %arg1: i32, %arg2: memref<8x32xbf16, #tpu.memory_space<vmem>>, %arg3: memref<32x128xbf16, #tpu.memory_space<vmem>>, %arg4: memref<8x1xi32, #tpu.memory_space<vmem>>, %arg5: memref<8x128xf32, #tpu.memory_space<vmem>>) attributes {dimension_semantics = [#tpu.dimension_semantics<parallel>, #tpu.dimension_semantics<parallel>], iteration_bounds = array<i64: 1, 1>, scalar_prefetch = 0 : i64, scratch_operands = 0 : i64, tpu.core_type = #tpu.core_type<tc>, window_params = [{transform_indices = @transform_0, window_bounds = array<i64: 8, 32>}, {transform_indices = @transform_1, window_bounds = array<i64: 32, 128>}, {transform_indices = @transform_2, window_bounds = array<i64: 8, 1>}, {transform_indices = @transform_3, window_bounds = array<i64: 8, 128>}]} {
    %c0 = arith.constant 0 : index
    %c0_0 = arith.constant 0 : index
    %0 = vector.load %arg2[%c0, %c0_0] : memref<8x32xbf16, #tpu.memory_space<vmem>>, vector<8x32xbf16>
    %c0_1 = arith.constant 0 : index
    %c0_2 = arith.constant 0 : index
    %1 = vector.load %arg3[%c0_1, %c0_2] : memref<32x128xbf16, #tpu.memory_space<vmem>>, vector<32x128xbf16>
    %cst = arith.constant dense<0.000000e+00> : vector<8x128xf32>
    %2 = tpu.matmul %0, %1, %cst {dimension_numbers = #tpu.dot_dimension_numbers<[1], [0], [0], [1], [0, 0, 1, 1], [], []>} : vector<8x32xbf16>, vector<32x128xbf16>, vector<8x128xf32> -> vector<8x128xf32>
    %cst_3 = arith.constant 6.400000e+01 : f32
    %3 = vector.broadcast %cst_3 : f32 to vector<8x128xf32>
    %4 = arith.mulf %2, %3 : vector<8x128xf32>
    %cst_4 = arith.constant -6.400000e+01 : f32
    %cst_5 = arith.constant 6.400000e+01 : f32
    %5 = vector.broadcast %cst_4 : f32 to vector<8x128xf32>
    %6 = arith.maximumf %5, %4 : vector<8x128xf32>
    %7 = vector.broadcast %cst_5 : f32 to vector<8x128xf32>
    %8 = arith.minimumf %7, %6 : vector<8x128xf32>
    %c128_i32 = arith.constant 128 : i32
    %9 = arith.muli %arg0, %c128_i32 : i32
    %10 = tpu.iota {dimensions = array<i32: 1>} : vector<8x128xi32>
    %c0_6 = arith.constant 0 : index
    %c0_7 = arith.constant 0 : index
    %11 = vector.load %arg4[%c0_6, %c0_7] : memref<8x1xi32, #tpu.memory_space<vmem>>, vector<8x1xi32>
    %12 = vector.broadcast %9 : i32 to vector<8x1xi32>
    %13 = arith.subi %11, %12 : vector<8x1xi32>
    %14 = vector.broadcast %13 : vector<8x1xi32> to vector<8x128xi32>
    %15 = arith.cmpi eq, %10, %14 : vector<8x128xi32>
    %cst_8 = arith.constant 2.240000e+01 : f32
    %16 = vector.broadcast %cst_8 : f32 to vector<8x128xf32>
    %17 = arith.subf %8, %16 : vector<8x128xf32>
    %18 = arith.select %15, %17, %8 : vector<8x128xi1>, vector<8x128xf32>
    %c0_9 = arith.constant 0 : index
    %c0_10 = arith.constant 0 : index
    %19 = vector.load %arg5[%c0_9, %c0_10] : memref<8x128xf32, #tpu.memory_space<vmem>>, vector<8x128xf32>
    tpu.vector_store %arg5[%c0_9, %c0_10], %18 {strides = array<i32>} : memref<8x128xf32, #tpu.memory_space<vmem>>, vector<8x128xf32>,
    return
  }
  func.func @transform_0(%arg0: i32, %arg1: i32) -> (i32, i32) {
    %c0_i32 = arith.constant 0 : i32
    %c0_i32_0 = arith.constant 0 : i32
    return %arg1, %c0_i32 : i32, i32
  }
  func.func @transform_1(%arg0: i32, %arg1: i32) -> (i32, i32) {
    %c0_i32 = arith.constant 0 : i32
    %c0_i32_0 = arith.constant 0 : i32
    return %c0_i32, %arg0 : i32, i32
  }
  func.func @transform_2(%arg0: i32, %arg1: i32) -> (i32, i32) {
    %c0_i32 = arith.constant 0 : i32
    %c0_i32_0 = arith.constant 0 : i32
    return %arg1, %c0_i32 : i32, i32
  }
  func.func @transform_3(%arg0: i32, %arg1: i32) -> (i32, i32) {
    %c0_i32 = arith.constant 0 : i32
    return %arg1, %arg0 : i32, i32
  }
}

</mosaic_0001>

<llo_original>
// kernel: tpu_custom_call.1
$region0: #{tpu_custom_call.1}
  #allocation0 [shape = 'u32[]', space=smem, size = 0x4, offset = 0x4, fixed_abs, tag = 'smem constant byte address 0x4 - core index']
  #allocation1 [shape = 'u32[72,128]{1,0:T(1,128)}', space=vmem, size = 0x9000, scoped, tag = 'internal scratch']
  %s0 = inlined_call_operand.vmem [shape: bf16[8,32], index: 0, kind: input, shape index: {}]
  %s1 = inlined_call_operand.hbm [shape: bf16[32,128], index: 1, kind: input, shape index: {}]
  %s2 = inlined_call_operand.vmem [shape: s32[8,1], index: 2, kind: input, shape index: {}]
  %s3 = inlined_call_operand.hbm [shape: f32[8,128], index: 3, kind: output, shape index: {}]
  %s4 = sld [smem:[#allocation0]]
  $region26: #{tpu_custom_call.1} parent=0
    _
  %s6 = ssub.s32 1, %s4
  %s7 = scalar_select 0, %s6, %s4
  $region1: #{tpu_custom_call.1} parent=0
    #allocation2 [shape = 'u8[8192]{0}', space=vmem, size = 0x2000, scoped, tag = 'input window, operand 1, single buffered']
    #allocation3 [shape = 's32[1]{0}', space=sflag, size = 0x4, scoped, tag = 'scoped memory for tpu_custom_call.1']
    #allocation4 [shape = 's32[1]{0}', space=sflag, size = 0x4, scoped, tag = 'scoped memory for tpu_custom_call.1']
    #allocation5 [shape = 'u8[4096]{0}', space=vmem, size = 0x1000, scoped, tag = 'output window, operand 0, single buffered']
    %8 = vsyncpa [#allocation3], 0
    %9 = vsyncpa [#allocation4], 0
    // Predicated region
    $region2: #{tpu_custom_call.1} parent=1 // pred_check
      _
    $region3: #{tpu_custom_call.1} parent=1 // pred_check_branch
      %11 = sbr.rel (0) target = $region5
    $region4: #{tpu_custom_call.1} parent=1 // pred_region
      _
    $region5: #{tpu_custom_call.1} parent=1 // pred_fallthru
      _
    // Predicated region
    $region6: #{tpu_custom_call.1} parent=1 // pred_check
      _
    $region7: #{tpu_custom_call.1} parent=1 // pred_check_branch
      %13 = sbr.rel (0) target = $region9
    $region8: #{tpu_custom_call.1} parent=1 // pred_region
      %15 = vsyncadd [#allocation3], 0
      %s16 = sshll.u32 %s1, 4
      %s17 = int_to_ptr.hbm [resolvable:$true] %s16
      %s18 = sshll.u32 [#allocation2], 4
      %s19 = int_to_ptr.vmem [resolvable:$true] %s18
      %24 = dma.hbm_to_vmem [thread:$0]  %s17, 256, %s19, [#allocation3], 64, 64, 4
    $region9: #{tpu_custom_call.1} parent=1 // pred_fallthru
      _
    // Predicated region
    $region10: #{tpu_custom_call.1} parent=1 // pred_check
      _
    $region11: #{tpu_custom_call.1} parent=1 // pred_check_branch
      %26 = sbr.rel (0) target = $region13
    $region12: #{tpu_custom_call.1} parent=1 // pred_region
      _
    $region13: #{tpu_custom_call.1} parent=1 // pred_fallthru
      _
    // Predicated region
    $region14: #{tpu_custom_call.1} parent=1 // pred_check
      _
    $region15: #{tpu_custom_call.1} parent=1 // pred_check_branch
      %28 = sbr.rel (0) target = $region17
    $region16: #{tpu_custom_call.1} parent=1 // pred_region
      %30 = dma.done [#allocation3], 256
    $region17: #{tpu_custom_call.1} parent=1 // pred_fallthru
      _
    %v32 = vld [vmem:[%s0] sm:$0xf]
    %v33 = vld [vmem:[#allocation2] sm:$0xf]
    %v34 = vld [vmem:[#allocation2 + $0x4] sm:$0xf]
    %v35 = vld [vmem:[#allocation2 + $0x8] sm:$0xf]
    %v36 = vld [vmem:[#allocation2 + $0xc] sm:$0xf]
    %v41 = vunpack.c.l.b16 %v33
    %v42 = vunpack.c.l.b16 %v34
    %v43 = vunpack.c.l.b16 %v35
    %v44 = vunpack.c.l.b16 %v36
    %v45 = vpack.c.b16 %v42, %v41
    %v46 = vpack.c.b16 %v44, %v43
    %vm49 = vcmask 261120
    %v51 = vsel %vm49, %v32, 0
    %53 = vmatpush.bf16.msra.mxu0 0
    %54 = vmatpush.bf16.msra.mxu0 0
    %55 = vmatpush.bf16.msra.mxu0 0
    %56 = vmatpush.bf16.msra.mxu0 0
    %57 = vmatpush.bf16.msra.mxu0 0
    %58 = vmatpush.bf16.msra.mxu0 0
    %59 = vmatpush.bf16.msra.mxu0 %v46
    %60 = vmatpush.bf16.msra.mxu0 %v45
    %61 = vmatmul.bf16.gmra.mxu0 %v51
    %v62 = vpop.f32.mrf.mxu0
    %v63 = vadd.f32 0.0, %v62
    %v64 = vpop.f32.mrf.mxu0
    %65 = vdwg.mxu0
    %v66 = vmul.f32 %v63, 64.0
    %v67 = vmax.f32 %v66, -64.0
    %v68 = vmin.f32 %v67, 64.0
    %s69 = smul.u32 0, 128
    %v70 = vlaneseq
    %v71 = vand.u32 %v70, 127
    %v72 = vld [vmem:[%s2] sm:$0xff]
    %v73 = vstv %s69
    %v74 = vsub.s32 %v72, %v73
    %75 = vset.pattern.permute.xlu0 0
    %76 = vperm.xlu0 %75, %v74
    %v77 = vpop.permute.xlu0 %76
    %vm78 = vcmp.eq.s32.totalorder %v71, %v77
    %v79 = vsub.f32 %v68, 22.4
    %v80 = vsel %vm78, %v79, %v68
    %81 = vst [vmem:[#allocation5] sm:$0xff] %v80
    // Predicated region
    $region18: #{tpu_custom_call.1} parent=1 // pred_check
      _
    $region19: #{tpu_custom_call.1} parent=1 // pred_check_branch
      %83 = sbr.rel (0) target = $region21
    $region20: #{tpu_custom_call.1} parent=1 // pred_region
      %85 = vsyncadd [#allocation4], 0
      %s87 = sshll.u32 [#allocation5], 4
      %s88 = int_to_ptr.vmem [resolvable:$true] %s87
      %s89 = sshll.u32 %s3, 4
      %s90 = int_to_ptr.hbm [resolvable:$true] %s89
      %92 = dma.vmem_to_hbm [thread:$0]  %s88, 128, %s90, [#allocation4]
    $region21: #{tpu_custom_call.1} parent=1 // pred_fallthru
      _
    // Predicated region
    $region22: #{tpu_custom_call.1} parent=1 // pred_check
      _
    $region23: #{tpu_custom_call.1} parent=1 // pred_check_branch
      %94 = sbr.rel (0) target = $region25
    $region24: #{tpu_custom_call.1} parent=1 // pred_region
      %96 = dma.done [#allocation4], 128
    $region25: #{tpu_custom_call.1} parent=1 // pred_fallthru
      _
    %97 = vsyncpa [#allocation3], 1
    %98 = vsyncpa [#allocation4], 1

</llo_original>
